<compile_context>
chip_gen: v7x
topology: tpu7x:2x2x1
jax: 0.10.0
libtpu: 0.0.40
codegen_flags: <defaults>
</compile_context>

<pallas_src>
import functools

import numpy as np

import jax
import jax.numpy as jnp
from jax.experimental import pallas as pl
from jax.experimental.pallas import tpu as pltpu


N_LANDMARKS = 68
N_DIMS = 3
N_COLS = N_LANDMARKS * N_DIMS  # 204
LANE = 128

# TODO(synk): `landmark_classes` is an undefined module-level global in
# make_it_talk/utils/losses.py; the standard 68-point facial-landmark grouping
# is assumed here.
LANDMARK_CLASSES = [
    list(range(0, 17)),    # jaw
    list(range(17, 22)),   # right eyebrow
    list(range(22, 27)),   # left eyebrow
    list(range(27, 31)),   # nose bridge
    list(range(31, 36)),   # lower nose
    list(range(36, 42)),   # right eye
    list(range(42, 48)),   # left eye
    list(range(48, 60)),   # outer lip
    list(range(60, 68)),   # inner lip
]
N_CLASSES = len(LANDMARK_CLASSES)
W_COLS = N_DIMS * (N_CLASSES + 1)        # 27 per-class cols + 3 "all landmarks" cols

_REALISM_JNP_THRESHOLD = 16384           # below this a Pallas launch is pure overhead


def _cdiv(a, b):
    return -(-a // b)


def _class_weight_matrix():
    """(204, 30) 0/1 membership matrix.

    Column 3*c+d          -> landmark belongs to class c (coordinate d).
    Column 3*N_CLASSES+d  -> every landmark ("total" columns): gives the total
                             SSE directly, so no 204-wide accumulator is needed.
    """
    w = np.zeros((N_COLS, W_COLS), np.float32)
    for c, idxs in enumerate(LANDMARK_CLASSES):
        for lm in idxs:
            for d in range(N_DIMS):
                w[lm * N_DIMS + d, c * N_DIMS + d] = 1.0
    for lm in range(N_LANDMARKS):
        for d in range(N_DIMS):
            w[lm * N_DIMS + d, N_CLASSES * N_DIMS + d] = 1.0
    return jnp.asarray(w)


# --------------------------- VMEM budgeting ---------------------------------

def _vmem_budget():
    """(per-pipeline-buffer byte target, explicit scoped-VMEM limit).

    Sized per generation: 128 MiB physical VMEM on v5e/v6e -> ~8 MiB buffers,
    64 MiB on v7x -> ~6 MiB buffers.  2 inputs x 2 pipeline buffers + the tiny
    weight matrix / accumulators must stay well under the limit.
    """
    try:
        cap = getattr(pltpu.get_tpu_info(), "vmem_capacity_bytes", None)
        vmem = int(cap) if cap else (64 << 20)
    except Exception:  # pragma: no cover - conservative (v7x-sized) fallback
        vmem = 64 << 20
    per_buffer = min(8 << 20, max(1 << 20, vmem // 10))
    vmem_limit = int(min((vmem * 3) // 4, 4 * per_buffer + (16 << 20)))
    return per_buffer, vmem_limit


def _pick_tile_rows(n_rows, n_cols, itemsize, target_bytes):
    """Largest multiple-of-8 row block whose *padded* footprint fits target_bytes.

    The last block dim is padded to 128 lanes on TPU, so the budget uses padded
    columns (204 -> 256, 16 -> 128, ...), not the raw column count.
    """
    if n_rows <= 8:
        return n_rows                              # full extent (allowed block shape)
    padded_cols = _cdiv(n_cols, LANE) * LANE
    bytes_per_row = max(1, padded_cols * int(itemsize))
    max_rows = max(8, (target_bytes // bytes_per_row) // 8 * 8)
    return n_rows if n_rows <= max_rows else int(max_rows)


# --------------------------- landmark statistics ----------------------------

def _landmark_stats_kernel(pred_ref, true_ref, w_ref, s2_ref, q_ref, *,
                           n_rows, tile_rows, steps_per_core, n_tiles, need_mask):
    c = pl.program_id(0)          # core-parallel axis (v7x megacore)
    i = pl.program_id(1)          # streaming reduction axis

    @pl.when(i == 0)
    def _init():
        s2_ref[...] = jnp.zeros_like(s2_ref)
        q_ref[...] = jnp.zeros_like(q_ref)

    d = pred_ref[...].astype(jnp.float32) - true_ref[...].astype(jnp.float32)

    def _accumulate(d):
        w = w_ref[...]
        # Per-(row, class, coord) sums of diff and diff^2 on the otherwise-idle
        # MXU; the remaining row reduce is a single-vreg-wide add chain.
        cls = jnp.dot(d, w, preferred_element_type=jnp.float32)       # (tile, 30)
        s2 = jnp.dot(d * d, w, preferred_element_type=jnp.float32)    # (tile, 30)
        s2_ref[...] += jnp.sum(s2, axis=0, keepdims=True)[None]
        q_ref[...] += jnp.sum(cls * cls, axis=0, keepdims=True)[None]

    if need_mask:
        # Mask only on the last real tile (and the at-most-one padding tile the
        # core split can introduce); every other tile runs the unmasked path.
        t = c * steps_per_core + i
        is_tail = t >= n_tiles - 1

        @pl.when(is_tail)
        def _masked():
            row_ids = t * tile_rows + jax.lax.broadcasted_iota(jnp.int32, d.shape, 0)
            _accumulate(jnp.where(row_ids < n_rows, d, 0.0))

        @pl.when(jnp.logical_not(is_tail))
        def _unmasked():
            _accumulate(d)
    else:
        _accumulate(d)


def _landmark_sums(pred2d, true2d, w, *, tile_rows_override=None):
    n_rows = pred2d.shape[0]
    itemsize = max(jnp.dtype(pred2d.dtype).itemsize,
                   jnp.dtype(true2d.dtype).itemsize)
    target_bytes, vmem_limit = _vmem_budget()
    tile_rows = tile_rows_override or _pick_tile_rows(
        n_rows, N_COLS, itemsize, target_bytes)
    tile_rows = min(tile_rows, n_rows)

    n_tiles = _cdiv(n_rows, tile_rows)
    n_cores = 2 if n_tiles >= 2 else 1              # split the row stream across TCs
    steps = _cdiv(n_tiles, n_cores)
    need_mask = (n_rows % tile_rows != 0) or (n_tiles % n_cores != 0)

    def row_block(c, i):
        # Clamp the (at most one) padding tile of the core split onto the last
        # real block; its contribution is fully masked to zero in the kernel.
        return (jnp.minimum(c * steps + i, n_tiles - 1), 0)

    kernel = functools.partial(
        _landmark_stats_kernel, n_rows=n_rows, tile_rows=tile_rows,
        steps_per_core=steps, n_tiles=n_tiles, need_mask=need_mask)

    cost = pl.CostEstimate(
        flops=int(n_rows * (2 * N_COLS + 4 * N_COLS * W_COLS + 4 * W_COLS)),
        transcendentals=0,
        bytes_accessed=int(2 * n_rows * N_COLS * itemsize
                           + N_COLS * W_COLS * 4 + 2 * n_cores * W_COLS * 4))

    s2_out, q_out = pl.pallas_call(
        kernel,
        out_shape=(jax.ShapeDtypeStruct((n_cores, 1, W_COLS), jnp.float32),
                   jax.ShapeDtypeStruct((n_cores, 1, W_COLS), jnp.float32)),
        grid_spec=pltpu.PrefetchScalarGridSpec(
            num_scalar_prefetch=0,
            grid=(n_cores, steps),
            in_specs=[
                pl.BlockSpec((tile_rows, N_COLS), row_block),
                pl.BlockSpec((tile_rows, N_COLS), row_block),
                pl.BlockSpec((N_COLS, W_COLS), lambda c, i: (0, 0)),
            ],
            out_specs=[
                pl.BlockSpec((1, 1, W_COLS), lambda c, i: (c, 0, 0)),
                pl.BlockSpec((1, 1, W_COLS), lambda c, i: (c, 0, 0)),
            ],
        ),
        compiler_params=pltpu.CompilerParams(
            dimension_semantics=("parallel", "arbitrary"),
            vmem_limit_bytes=vmem_limit,
        ),
        cost_estimate=cost,
    )(pred2d, true2d, w)

    # One partial per core; combine in the wrapper (v7x runs cores in parallel).
    return jnp.sum(s2_out, axis=(0, 1)), jnp.sum(q_out, axis=(0, 1))


# ----------------------------- realism term --------------------------------

def _realism_stats_kernel(r_ref, out_ref, *, valid_rows_last, need_mask):
    i = pl.program_id(0)

    @pl.when(i == 0)
    def _init():
        out_ref[...] = jnp.zeros_like(out_ref)

    e = r_ref[...].astype(jnp.float32) - 1.0

    def _acc(e):
        out_ref[...] += jnp.sum(e * e, axis=0, keepdims=True)

    if need_mask:
        is_last = i == pl.num_programs(0) - 1

        @pl.when(is_last)
        def _masked():
            rows = jax.lax.broadcasted_iota(jnp.int32, e.shape, 0)
            _acc(jnp.where(rows < valid_rows_last, e, 0.0))

        @pl.when(jnp.logical_not(is_last))
        def _unmasked():
            _acc(e)
    else:
        _acc(e)


def _sum_sq_err_to_one(realism, *, tile_rows_override=None):
    """sum((realism - 1)^2) over all elements."""
    n = int(realism.size)
    if n <= _REALISM_JNP_THRESHOLD:
        # Tiny discriminator outputs: a Pallas launch is pure overhead.
        r = realism.astype(jnp.float32)
        return jnp.sum((r - 1.0) ** 2)

    # Lane-dense view: flatten and reshape to (rows, 128).  The <=127 pad
    # elements use the neutral value 1.0, so they contribute exactly zero.
    flat = realism.reshape(-1)
    pad = (-n) % LANE
    if pad:
        flat = jnp.concatenate([flat, jnp.full((pad,), 1, dtype=flat.dtype)])
    r2d = flat.reshape(-1, LANE)
    n_rows = r2d.shape[0]

    itemsize = jnp.dtype(r2d.dtype).itemsize
    target_bytes, vmem_limit = _vmem_budget()
    tile_rows = tile_rows_override or _pick_tile_rows(
        n_rows, LANE, itemsize, target_bytes)
    tile_rows = min(tile_rows, n_rows)
    n_tiles = _cdiv(n_rows, tile_rows)
    need_mask = (n_rows % tile_rows) != 0
    valid_rows_last = n_rows - (n_tiles - 1) * tile_rows

    kernel = functools.partial(_realism_stats_kernel,
                               valid_rows_last=valid_rows_last,
                               need_mask=need_mask)
    out = pl.pallas_call(
        kernel,
        out_shape=jax.ShapeDtypeStruct((1, LANE), jnp.float32),
        grid_spec=pltpu.PrefetchScalarGridSpec(
            num_scalar_prefetch=0,
            grid=(n_tiles,),
            in_specs=[pl.BlockSpec((tile_rows, LANE), lambda i: (i, 0))],
            out_specs=pl.BlockSpec((1, LANE), lambda i: (0, 0)),
        ),
        compiler_params=pltpu.CompilerParams(
            dimension_semantics=("arbitrary",),
            vmem_limit_bytes=vmem_limit,
        ),
    )(r2d)
    return jnp.sum(out)


# ------------------------------ full module ---------------------------------

def loss_for_generator(predicted_landmarks, predicted_realism, true_landmarks,
                       *, lambda_classes, mu_discriminator,
                       _tile_rows_override=None):
    batch = predicted_landmarks.shape[0]
    time = predicted_landmarks.shape[1]
    n_rows = batch * time

    # (B,T,204) or (B,T,68,3) -> (B*T, 204); contiguous reshape, no data copy.
    pred2d = predicted_landmarks.reshape(n_rows, N_COLS)
    true2d = true_landmarks.reshape(n_rows, N_COLS)

    w = _class_weight_matrix()
    s2, q = _landmark_sums(pred2d, true2d, w,
                           tile_rows_override=_tile_rows_override)

    npc = N_DIMS * N_CLASSES
    # mse_total from the "all landmarks" columns (total SSE / (B*T*68*3)).
    mse_total = jnp.sum(s2[npc:]) / float(n_rows * N_COLS)

    # Per-class MSE via sum_i (x_i - mean)^2 = S2 - S1^2/n, applied per
    # (batch, time, coord) on the per-class diffs.
    class_lens = jnp.asarray([len(ci) for ci in LANDMARK_CLASSES], jnp.float32)
    s2_per_class = s2[:npc].reshape(N_CLASSES, N_DIMS).sum(axis=-1)
    q_per_class = q[:npc].reshape(N_CLASSES, N_DIMS).sum(axis=-1)
    mse_classes = (s2_per_class - q_per_class / class_lens) / (
        float(n_rows * N_DIMS) * class_lens)
    mse_classes_mean = jnp.mean(mse_classes)

    realism_loss = _sum_sq_err_to_one(
        predicted_realism,
        tile_rows_override=_tile_rows_override) / float(predicted_realism.size)

    return (mse_total
            + lambda_classes * mse_classes_mean
            + mu_discriminator * realism_loss)


# ------------------------------ reference -----------------------------------

def _reference_loss(predicted_landmarks, predicted_realism, true_landmarks,
                    *, lambda_classes, mu_discriminator):
    realism_loss = jnp.mean((predicted_realism.astype(jnp.float32) - 1.0) ** 2)
    b, t = predicted_landmarks.shape[0], predicted_landmarks.shape[1]
    p = predicted_landmarks.reshape(b, t, N_LANDMARKS, N_DIMS).astype(jnp.float32)
    tr = true_landmarks.reshape(b, t, N_LANDMARKS, N_DIMS).astype(jnp.float32)
    mse_total = jnp.mean((p - tr) ** 2)
    mses = []
    for idxs in LANDMARK_CLASSES:
        n = len(idxs)
        sel = jnp.asarray(idxs)
        pc = p[:, :, sel, :]
        tc = tr[:, :, sel, :]
        pc = pc - pc.mean(axis=2, keepdims=True)
        tc = tc - tc.mean(axis=2, keepdims=True)
        mses.append(jnp.sum((pc - tc) ** 2) / float(b * t * n * N_DIMS))
    mse_classes_mean = jnp.mean(jnp.stack(mses))
    return (mse_total + lambda_classes * mse_classes_mean
            + mu_discriminator * realism_loss)


if __name__ == "__main__":
    lambda_classes = 0.5
    mu_discriminator = 0.01

    # --- primary small-shape check (single tile, single core, jnp realism) ---
    key = jax.random.PRNGKey(0)
    k1, k2, k3 = jax.random.split(key, 3)
    batch, time = 2, 8
    predicted_landmarks = jax.random.normal(
        k1, (batch, time, N_LANDMARKS, N_DIMS), dtype=jnp.float32)
    true_landmarks = jax.random.normal(
        k2, (batch, time, N_LANDMARKS, N_DIMS), dtype=jnp.float32)
    predicted_realism = jax.random.normal(k3, (batch, time, 1), dtype=jnp.float32)

    loss = loss_for_generator(
        predicted_landmarks, predicted_realism, true_landmarks,
        lambda_classes=lambda_classes, mu_discriminator=mu_discriminator)
    loss = jax.block_until_ready(loss)
    ref = _reference_loss(
        predicted_landmarks, predicted_realism, true_landmarks,
        lambda_classes=lambda_classes, mu_discriminator=mu_discriminator)
    assert jnp.allclose(loss, ref, rtol=1e-4, atol=1e-5), (float(loss), float(ref))

    # --- secondary check: multi-tile grid, dual-core split, ragged-tail mask,
    #     3-D landmark input, and the lane-dense Pallas realism path ----------
    kb1, kb2, kb3 = jax.random.split(jax.random.PRNGKey(1), 3)
    b2, t2 = 3, 701
    pl2 = jax.random.normal(kb1, (b2, t2, N_COLS), dtype=jnp.float32)
    tl2 = jax.random.normal(kb2, (b2, t2, N_COLS), dtype=jnp.float32)
    pr2 = jax.random.normal(kb3, (b2, t2, 16), dtype=jnp.float32)
    loss2 = loss_for_generator(
        pl2, pr2, tl2, lambda_classes=lambda_classes,
        mu_discriminator=mu_discriminator, _tile_rows_override=128)
    loss2 = jax.block_until_ready(loss2)
    ref2 = _reference_loss(
        pl2, pr2, tl2, lambda_classes=lambda_classes,
        mu_discriminator=mu_discriminator)
    assert jnp.allclose(loss2, ref2, rtol=1e-4, atol=1e-5), (float(loss2), float(ref2))

    print("KERNEL_OK")
</pallas_src>

<mosaic_0001>
module attributes {stable_mosaic.version = 11 : i64} {
  func.func @_landmark_stats_kernel(%arg0: i32, %arg1: i32, %arg2: memref<16x204xf32, #tpu.memory_space<vmem>>, %arg3: memref<16x204xf32, #tpu.memory_space<vmem>>, %arg4: memref<204x30xf32, #tpu.memory_space<vmem>>, %arg5: memref<1x1x30xf32, #tpu.memory_space<vmem>>, %arg6: memref<1x1x30xf32, #tpu.memory_space<vmem>>) attributes {dimension_semantics = [#tpu.dimension_semantics<parallel>, #tpu.dimension_semantics<arbitrary>], iteration_bounds = array<i64: 1, 1>, scalar_prefetch = 0 : i64, scratch_operands = 0 : i64, tpu.core_type = #tpu.core_type<tc>, window_params = [{transform_indices = @transform_0, window_bounds = array<i64: 16, 204>}, {transform_indices = @transform_1, window_bounds = array<i64: 16, 204>}, {pipeline_mode = #tpu.pipeline_mode<synchronous>, transform_indices = @transform_2, window_bounds = array<i64: 204, 30>}, {transform_indices = @transform_3, window_bounds = array<i64: 1, 1, 30>}, {transform_indices = @transform_4, window_bounds = array<i64: 1, 1, 30>}]} {
    %c0_i32 = arith.constant 0 : i32
    %0 = arith.cmpi eq, %arg1, %c0_i32 : i32
    %1 = arith.extui %0 : i1 to i32
    %c0_i32_0 = arith.constant 0 : i32
    %2 = arith.cmpi ne, %1, %c0_i32_0 : i32
    scf.if %2 {
      %cst_21 = arith.constant 0.000000e+00 : f32
      %23 = vector.broadcast %cst_21 : f32 to vector<1x1x30xf32>
      %c0_22 = arith.constant 0 : index
      %c0_23 = arith.constant 0 : index
      %c0_24 = arith.constant 0 : index
      %24 = vector.load %arg5[%c0_22, %c0_23, %c0_24] : memref<1x1x30xf32, #tpu.memory_space<vmem>>, vector<1x1x30xf32>
      tpu.vector_store %arg5[%c0_22, %c0_23, %c0_24], %23 {strides = array<i32>} : memref<1x1x30xf32, #tpu.memory_space<vmem>>, vector<1x1x30xf32>,
      %cst_25 = arith.constant 0.000000e+00 : f32
      %25 = vector.broadcast %cst_25 : f32 to vector<1x1x30xf32>
      %c0_26 = arith.constant 0 : index
      %c0_27 = arith.constant 0 : index
      %c0_28 = arith.constant 0 : index
      %26 = vector.load %arg6[%c0_26, %c0_27, %c0_28] : memref<1x1x30xf32, #tpu.memory_space<vmem>>, vector<1x1x30xf32>
      tpu.vector_store %arg6[%c0_26, %c0_27, %c0_28], %25 {strides = array<i32>} : memref<1x1x30xf32, #tpu.memory_space<vmem>>, vector<1x1x30xf32>,
    } else {
    }
    %c0 = arith.constant 0 : index
    %c0_1 = arith.constant 0 : index
    %3 = vector.load %arg2[%c0, %c0_1] : memref<16x204xf32, #tpu.memory_space<vmem>>, vector<16x204xf32>
    %c0_2 = arith.constant 0 : index
    %c0_3 = arith.constant 0 : index
    %4 = vector.load %arg3[%c0_2, %c0_3] : memref<16x204xf32, #tpu.memory_space<vmem>>, vector<16x204xf32>
    %5 = arith.subf %3, %4 : vector<16x204xf32>
    %c0_4 = arith.constant 0 : index
    %c0_5 = arith.constant 0 : index
    %6 = vector.load %arg4[%c0_4, %c0_5] : memref<204x30xf32, #tpu.memory_space<vmem>>, vector<204x30xf32>
    %cst = arith.constant dense<0.000000e+00> : vector<16x30xf32>
    %7 = tpu.matmul %5, %6, %cst {dimension_numbers = #tpu.dot_dimension_numbers<[1], [0], [0], [1], [0, 0, 1, 1], [], []>} : vector<16x204xf32>, vector<204x30xf32>, vector<16x30xf32> -> vector<16x30xf32>
    %8 = arith.mulf %5, %5 : vector<16x204xf32>
    %cst_6 = arith.constant dense<0.000000e+00> : vector<16x30xf32>
    %9 = tpu.matmul %8, %6, %cst_6 {dimension_numbers = #tpu.dot_dimension_numbers<[1], [0], [0], [1], [0, 0, 1, 1], [], []>} : vector<16x204xf32>, vector<204x30xf32>, vector<16x30xf32> -> vector<16x30xf32>
    %c0_7 = arith.constant 0 : index
    %c0_8 = arith.constant 0 : index
    %c0_9 = arith.constant 0 : index
    %10 = vector.load %arg5[%c0_7, %c0_8, %c0_9] : memref<1x1x30xf32, #tpu.memory_space<vmem>>, vector<1x1x30xf32>
    %cst_10 = arith.constant dense<0.000000e+00> : vector<30xf32>
    %11 = vector.multi_reduction <add>, %9, %cst_10 [0] : vector<16x30xf32> to vector<30xf32>
    %12 = vector.shape_cast %11 : vector<30xf32> to vector<1x30xf32>
    %13 = vector.shape_cast %12 : vector<1x30xf32> to vector<1x1x30xf32>
    %14 = arith.addf %10, %13 : vector<1x1x30xf32>
    %c0_11 = arith.constant 0 : index
    %c0_12 = arith.constant 0 : index
    %c0_13 = arith.constant 0 : index
    %15 = vector.load %arg5[%c0_11, %c0_12, %c0_13] : memref<1x1x30xf32, #tpu.memory_space<vmem>>, vector<1x1x30xf32>
    tpu.vector_store %arg5[%c0_11, %c0_12, %c0_13], %14 {strides = array<i32>} : memref<1x1x30xf32, #tpu.memory_space<vmem>>, vector<1x1x30xf32>,
    %c0_14 = arith.constant 0 : index
    %c0_15 = arith.constant 0 : index
    %c0_16 = arith.constant 0 : index
    %16 = vector.load %arg6[%c0_14, %c0_15, %c0_16] : memref<1x1x30xf32, #tpu.memory_space<vmem>>, vector<1x1x30xf32>
    %17 = arith.mulf %7, %7 : vector<16x30xf32>
    %cst_17 = arith.constant dense<0.000000e+00> : vector<30xf32>
    %18 = vector.multi_reduction <add>, %17, %cst_17 [0] : vector<16x30xf32> to vector<30xf32>
    %19 = vector.shape_cast %18 : vector<30xf32> to vector<1x30xf32>
    %20 = vector.shape_cast %19 : vector<1x30xf32> to vector<1x1x30xf32>
    %21 = arith.addf %16, %20 : vector<1x1x30xf32>
    %c0_18 = arith.constant 0 : index
    %c0_19 = arith.constant 0 : index
    %c0_20 = arith.constant 0 : index
    %22 = vector.load %arg6[%c0_18, %c0_19, %c0_20] : memref<1x1x30xf32, #tpu.memory_space<vmem>>, vector<1x1x30xf32>
    tpu.vector_store %arg6[%c0_18, %c0_19, %c0_20], %21 {strides = array<i32>} : memref<1x1x30xf32, #tpu.memory_space<vmem>>, vector<1x1x30xf32>,
    return
  }
  func.func @transform_0(%arg0: i32, %arg1: i32) -> (i32, i32) {
    %c1_i32 = arith.constant 1 : i32
    %0 = arith.muli %arg0, %c1_i32 : i32
    %1 = arith.addi %0, %arg1 : i32
    %c0_i32 = arith.constant 0 : i32
    %2 = arith.minsi %1, %c0_i32 : i32
    %c0_i32_0 = arith.constant 0 : i32
    %c0_i32_1 = arith.constant 0 : i32
    return %2, %c0_i32_0 : i32, i32
  }
  func.func @transform_1(%arg0: i32, %arg1: i32) -> (i32, i32) {
    %c1_i32 = arith.constant 1 : i32
    %0 = arith.muli %arg0, %c1_i32 : i32
    %1 = arith.addi %0, %arg1 : i32
    %c0_i32 = arith.constant 0 : i32
    %2 = arith.minsi %1, %c0_i32 : i32
    %c0_i32_0 = arith.constant 0 : i32
    %c0_i32_1 = arith.constant 0 : i32
    return %2, %c0_i32_0 : i32, i32
  }
  func.func @transform_2(%arg0: i32, %arg1: i32) -> (i32, i32) {
    %c0_i32 = arith.constant 0 : i32
    %c0_i32_0 = arith.constant 0 : i32
    %c0_i32_1 = arith.constant 0 : i32
    return %c0_i32, %c0_i32_0 : i32, i32
  }
  func.func @transform_3(%arg0: i32, %arg1: i32) -> (i32, i32, i32) {
    %c0_i32 = arith.constant 0 : i32
    %c0_i32_0 = arith.constant 0 : i32
    %c0_i32_1 = arith.constant 0 : i32
    return %arg0, %c0_i32, %c0_i32_0 : i32, i32, i32
  }
  func.func @transform_4(%arg0: i32, %arg1: i32) -> (i32, i32, i32) {
    %c0_i32 = arith.constant 0 : i32
    %c0_i32_0 = arith.constant 0 : i32
    %c0_i32_1 = arith.constant 0 : i32
    return %arg0, %c0_i32, %c0_i32_0 : i32, i32, i32
  }
}

</mosaic_0001>

<llo_original>
// kernel: tpu_custom_call.1
$region0: #{tpu_custom_call.1}
  #allocation0 [shape = 'u32[]', space=smem, size = 0x4, offset = 0x4, fixed_abs, tag = 'smem constant byte address 0x4 - core index']
  #allocation1 [shape = 'u32[144,128]{1,0:T(1,128)}', space=vmem, size = 0x12000, scoped, tag = 'internal scratch']
  %s0 = inlined_call_operand.vmem [shape: f32[16,204], index: 0, kind: input, shape index: {}]
  %s1 = inlined_call_operand.vmem [shape: f32[16,204], index: 1, kind: input, shape index: {}]
  %s2 = inlined_call_operand.vmem [shape: f32[204,30], index: 2, kind: input, shape index: {}]
  %s3 = inlined_call_operand.hbm [shape: f32[1,1,30], index: 3, kind: output, shape index: {0}]
  %s4 = inlined_call_operand.hbm [shape: f32[1,1,30], index: 4, kind: output, shape index: {1}]
  %5 = xla_tuple %s3, %s4
  %s6 = sld [smem:[#allocation0]]
  $region34: #{tpu_custom_call.1} parent=0
    _
  %s8 = ssub.s32 1, %s6
  %s9 = scalar_select 0, %s8, %s6
  $region1: #{tpu_custom_call.1} parent=0
    #allocation2 [shape = 'u8[512]{0}', space=vmem, size = 0x400, scoped, tag = 'output window, operand 0, single buffered']
    #allocation3 [shape = 's32[1]{0}', space=sflag, size = 0x4, scoped, tag = 'scoped memory for tpu_custom_call.1']
    #allocation4 [shape = 'u8[512]{0}', space=vmem, size = 0x400, scoped, tag = 'output window, operand 1, single buffered']
    #allocation5 [shape = 's32[1]{0}', space=sflag, size = 0x4, scoped, tag = 'scoped memory for tpu_custom_call.1']
    %10 = vsyncpa [#allocation3], 0
    %11 = vsyncpa [#allocation5], 0
    // Predicated region
    $region2: #{tpu_custom_call.1} parent=1 // pred_check
      _
    $region3: #{tpu_custom_call.1} parent=1 // pred_check_branch
      %13 = sbr.rel (0) target = $region5
    $region4: #{tpu_custom_call.1} parent=1 // pred_region
      %s14 = sadd.s32 0, 0
      %p15 = scmp.lt.s32.totalorder %s14, 0
      %s16 = scalar_select %p15, %s14, 0
      %s17 = smul.u32 2, %s16
      %p18 = scmp.lt.s32.totalorder %s17, 1
      %s19 = scalar_select %p18, %s17, 1
      %s20 = smul.addr %s19, 2
      %s21 = smul.addr %s20, 8
      %s22 = scalar_lea.vmem %s0, %s21
      %s23 = sadd.s32 0, 0
      %p24 = scmp.lt.s32.totalorder %s23, 0
      %s25 = scalar_select %p24, %s23, 0
      %s26 = smul.u32 2, %s25
    $region5: #{tpu_custom_call.1} parent=1 // pred_fallthru
      _
    // Predicated region
    $region6: #{tpu_custom_call.1} parent=1 // pred_check
      _
    $region7: #{tpu_custom_call.1} parent=1 // pred_check_branch
      %28 = sbr.rel (0) target = $region9
    $region8: #{tpu_custom_call.1} parent=1 // pred_region
      %s29 = sadd.s32 0, 0
      %p30 = scmp.lt.s32.totalorder %s29, 0
      %s31 = scalar_select %p30, %s29, 0
      %s32 = smul.u32 2, %s31
      %p33 = scmp.lt.s32.totalorder %s32, 1
      %s34 = scalar_select %p33, %s32, 1
      %s35 = smul.addr %s34, 2
      %s36 = smul.addr %s35, 8
      %s37 = scalar_lea.vmem %s1, %s36
      %s38 = sadd.s32 0, 0
      %p39 = scmp.lt.s32.totalorder %s38, 0
      %s40 = scalar_select %p39, %s38, 0
      %s41 = smul.u32 2, %s40
    $region9: #{tpu_custom_call.1} parent=1 // pred_fallthru
      _
    // Predicated region
    $region10: #{tpu_custom_call.1} parent=1 // pred_check
      _
    $region11: #{tpu_custom_call.1} parent=1 // pred_check_branch
      %43 = sbr.rel (0) target = $region13
    $region12: #{tpu_custom_call.1} parent=1 // pred_region
      _
    $region13: #{tpu_custom_call.1} parent=1 // pred_fallthru
      _
    %s44 = sadd.s32 0, 0
    %p45 = scmp.lt.s32.totalorder %s44, 0
    %s46 = scalar_select %p45, %s44, 0
    %s47 = smul.u32 2, %s46
    %p48 = scmp.lt.s32.totalorder %s47, 1
    %s49 = scalar_select %p48, %s47, 1
    %s50 = smul.addr %s49, 2
    %s51 = smul.addr %s50, 8
    %s52 = scalar_lea.vmem %s0, %s51
    %s53 = sadd.s32 0, 0
    %p54 = scmp.lt.s32.totalorder %s53, 0
    %s55 = scalar_select %p54, %s53, 0
    %s56 = smul.u32 2, %s55
    %p57 = scmp.lt.s32.totalorder %s56, 1
    %s58 = scalar_select %p57, %s56, 1
    %s59 = smul.addr %s58, 2
    %s60 = smul.addr %s59, 8
    %s61 = scalar_lea.vmem %s1, %s60
    %s62 = sadd.s32 0, 0
    %p63 = scmp.lt.s32.totalorder %s62, 0
    %s64 = scalar_select %p63, %s62, 0
    %s65 = smul.u32 2, %s64
    %p66 = scmp.lt.s32.totalorder %s65, 1
    %s67 = scalar_select %p66, %s65, 1
    %s68 = smul.addr %s67, 2
    %s69 = smul.addr %s68, 8
    %s70 = scalar_lea.vmem %s0, %s69
    %s71 = sadd.s32 0, 0
    %p72 = scmp.lt.s32.totalorder %s71, 0
    %s73 = scalar_select %p72, %s71, 0
    %s74 = smul.u32 2, %s73
    %s75 = sadd.s32 0, 0
    %p76 = scmp.lt.s32.totalorder %s75, 0
    %s77 = scalar_select %p76, %s75, 0
    %s78 = smul.u32 2, %s77
    %p79 = scmp.lt.s32.totalorder %s78, 1
    %s80 = scalar_select %p79, %s78, 1
    %s81 = smul.addr %s80, 2
    %s82 = smul.addr %s81, 8
    %s83 = scalar_lea.vmem %s1, %s82
    %s84 = sadd.s32 0, 0
    %p85 = scmp.lt.s32.totalorder %s84, 0
    %s86 = scalar_select %p85, %s84, 0
    %s87 = smul.u32 2, %s86
    %p88 = scmp.eq.s32.totalorder 0, 0
    // Predicated region
    $region14: #{tpu_custom_call.1} parent=1 // pred_check
      %p89 = pneg %p88
    $region15: #{tpu_custom_call.1} parent=1 // pred_check_branch
      %91 = sbr.rel (%p89) target = $region17
    $region16: #{tpu_custom_call.1} parent=1 // pred_region
      %vm92 = vcmask 237568
      %93 = vst.msk [vmem:[#allocation2] sm:$0x1] %vm92, 0.0
      %94 = vst.msk [vmem:[#allocation4] sm:$0x1] %vm92, 0.0
    $region17: #{tpu_custom_call.1} parent=1 // pred_fallthru
      _
    %v95 = vld [vmem:[%s70] sm:$0xff]
    %v96 = vld [vmem:[%s70 + $0x8] sm:$0xff]
    %v97 = vld [vmem:[%s70 + $0x10] sm:$0xff]
    %v98 = vld [vmem:[%s70 + $0x18] sm:$0xff]
    %v99 = vld [vmem:[%s83] sm:$0xff]
    %v100 = vld [vmem:[%s83 + $0x8] sm:$0xff]
    %v101 = vld [vmem:[%s83 + $0x10] sm:$0xff]
    %v102 = vld [vmem:[%s83 + $0x18] sm:$0xff]
    %v103 = vsub.f32 %v95, %v99
    %v104 = vsub.f32 %v96, %v100
    %v105 = vsub.f32 %v97, %v101
    %v106 = vsub.f32 %v98, %v102
    %v107 = vld [vmem:[%s2] sm:$0xff]
    %v108 = vld [vmem:[%s2 + $0x8] sm:$0xff]
    %v109 = vld [vmem:[%s2 + $0x10] sm:$0xff]
    %v110 = vld [vmem:[%s2 + $0x18] sm:$0xff]
    %v111 = vld [vmem:[%s2 + $0x20] sm:$0xff]
    %v112 = vld [vmem:[%s2 + $0x28] sm:$0xff]
    %v113 = vld [vmem:[%s2 + $0x30] sm:$0xff]
    %v114 = vld [vmem:[%s2 + $0x38] sm:$0xff]
    %v115 = vld [vmem:[%s2 + $0x40] sm:$0xff]
    %v116 = vld [vmem:[%s2 + $0x48] sm:$0xff]
    %v117 = vld [vmem:[%s2 + $0x50] sm:$0xff]
    %v118 = vld [vmem:[%s2 + $0x58] sm:$0xff]
    %v119 = vld [vmem:[%s2 + $0x60] sm:$0xff]
    %v120 = vld [vmem:[%s2 + $0x68] sm:$0xff]
    %v121 = vld [vmem:[%s2 + $0x70] sm:$0xff]
    %v122 = vld [vmem:[%s2 + $0x78] sm:$0xff]
    %v123 = vld [vmem:[%s2 + $0x80] sm:$0xff]
    %v124 = vld [vmem:[%s2 + $0x88] sm:$0xff]
    %v125 = vld [vmem:[%s2 + $0x90] sm:$0xff]
    %v126 = vld [vmem:[%s2 + $0x98] sm:$0xff]
    %v127 = vld [vmem:[%s2 + $0xa0] sm:$0xff]
    %v128 = vld [vmem:[%s2 + $0xa8] sm:$0xff]
    %v129 = vld [vmem:[%s2 + $0xb0] sm:$0xff]
    %v130 = vld [vmem:[%s2 + $0xb8] sm:$0xff]
    %v131 = vld [vmem:[%s2 + $0xc0] sm:$0xff]
    %v132 = vld [vmem:[%s2 + $0xc8] sm:$0xf]
    %vm133 = vcmask 621568
    %v135 = vsel %vm133, %v104, 0
    %v138 = vsel %vm133, %v106, 0
    %vm140 = vcmask 1043456
    %v142 = vsel %vm140, %v132, 0
    %144 = vmatprep.subr.mxu0 0.0
    %145 = vmatpush1.msra.mxu0 %v107
    %146 = vmatprep.subr.mxu0 0.0
    %147 = vmatpush1.msra.mxu0 %v108
    %148 = vmatprep.subr.mxu0 0.0
    %149 = vmatpush1.msra.mxu0 %v109
    %150 = vmatprep.subr.mxu0 0.0
    %151 = vmatpush1.msra.mxu0 %v110
    %152 = vmatprep.subr.mxu0 0.0
    %153 = vmatpush1.msra.mxu0 %v111
    %154 = vmatprep.subr.mxu0 0.0
    %155 = vmatpush1.msra.mxu0 %v112
    %156 = vmatprep.subr.mxu0 0.0
    %157 = vmatpush1.msra.mxu0 %v113
    %158 = vmatprep.subr.mxu0 0.0
    %159 = vmatpush1.msra.mxu0 %v114
    %160 = vmatprep.subr.mxu0 0.0
    %161 = vmatpush1.msra.mxu0 %v115
    %162 = vmatprep.subr.mxu0 0.0
    %163 = vmatpush1.msra.mxu0 %v116
    %164 = vmatprep.subr.mxu0 0.0
    %165 = vmatpush1.msra.mxu0 %v117
    %166 = vmatprep.subr.mxu0 0.0
    %167 = vmatpush1.msra.mxu0 %v118
    %168 = vmatprep.subr.mxu0 0.0
    %169 = vmatpush1.msra.mxu0 %v119
    %170 = vmatprep.subr.mxu0 0.0
    %171 = vmatpush1.msra.mxu0 %v120
    %172 = vmatprep.subr.mxu0 0.0
    %173 = vmatpush1.msra.mxu0 %v121
    %174 = vmatprep.subr.mxu0 0.0
    %175 = vmatpush1.msra.mxu0 %v122
    %176 = vmatprep.subr.mxu0 0.0
    %177 = vmatpush1.msra.mxu0 %v123
    %178 = vmatprep.subr.mxu0 0.0
    %179 = vmatpush1.msra.mxu0 %v124
    %180 = vmatprep.subr.mxu0 0.0
    %181 = vmatpush1.msra.mxu0 %v125
    %182 = vmatprep.subr.mxu0 0.0
    %183 = vmatpush1.msra.mxu0 %v126
    %184 = vmatprep.subr.mxu0 0.0
    %185 = vmatpush1.msra.mxu0 %v127
    %186 = vmatprep.subr.mxu0 0.0
    %187 = vmatpush1.msra.mxu0 %v128
    %188 = vmatprep.subr.mxu0 0.0
    %189 = vmatpush1.msra.mxu0 %v129
    %190 = vmatprep.subr.mxu0 0.0
    %191 = vmatpush1.msra.mxu0 %v130
    %192 = vmatprep.subr.mxu0 0.0
    %193 = vmatpush1.msra.mxu0 %v131
    %194 = vmatprep.subr.mxu0 0.0
    %195 = vmatpush1.msra.mxu0 %v142
    %196 = vmatprep.subr.mxu0 0.0
    %197 = vmatpush1.msra.mxu0 0.0
    %198 = vmatprep.subr.mxu0 0.0
    %199 = vmatpush1.msra.mxu0 0.0
    %200 = vmatprep.subr.mxu0 0.0
    %201 = vmatpush1.msra.mxu0 0.0
    %202 = vmatprep.subr.mxu0 0.0
    %203 = vmatpush1.msra.mxu0 0.0
    %204 = vmatprep.subr.mxu0 0.0
    %205 = vmatpush1.msra.mxu0 0.0
    %206 = vmatprep.subr.mxu0 0.0
    %207 = vmatpush1.msra.mxu0 0.0
    %208 = vmatprep.mubr.f32.mxu0 %v135
    %209 = vmatmul.mubr.f32.gmra.mrb[0].mxu0 %v103
    %v210 = vpop.f32.mrb[0].mxu0
    %v211 = vadd.f32 0.0, %v210
    %v212 = vpop.f32.mrb[0].mxu0
    %213 = vmatprep.mubr.f32.mxu0 %v138
    %214 = vmatmul.mubr.f32.gmra.mrb[0].mxu0 %v105
    %v215 = vpop.f32.mrb[0].mxu0
    %v216 = vadd.f32 0.0, %v215
    %v217 = vpop.f32.mrb[0].mxu0
    %218 = vdwg.mxu0
    %v219 = vmul.f32 %v103, %v103
    %v220 = vmul.f32 %v104, %v104
    %v221 = vmul.f32 %v105, %v105
    %v222 = vmul.f32 %v106, %v106
    %v224 = vsel %vm133, %v220, 0
    %v227 = vsel %vm133, %v222, 0
    %229 = vmatprep.subr.mxu0 0.0
    %230 = vmatpush1.msra.mxu0 %v107
    %231 = vmatprep.subr.mxu0 0.0
    %232 = vmatpush1.msra.mxu0 %v108
    %233 = vmatprep.subr.mxu0 0.0
    %234 = vmatpush1.msra.mxu0 %v109
    %235 = vmatprep.subr.mxu0 0.0
    %236 = vmatpush1.msra.mxu0 %v110
    %237 = vmatprep.subr.mxu0 0.0
    %238 = vmatpush1.msra.mxu0 %v111
    %239 = vmatprep.subr.mxu0 0.0
    %240 = vmatpush1.msra.mxu0 %v112
    %241 = vmatprep.subr.mxu0 0.0
    %242 = vmatpush1.msra.mxu0 %v113
    %243 = vmatprep.subr.mxu0 0.0
    %244 = vmatpush1.msra.mxu0 %v114
    %245 = vmatprep.subr.mxu0 0.0
    %246 = vmatpush1.msra.mxu0 %v115
    %247 = vmatprep.subr.mxu0 0.0
    %248 = vmatpush1.msra.mxu0 %v116
    %249 = vmatprep.subr.mxu0 0.0
    %250 = vmatpush1.msra.mxu0 %v117
    %251 = vmatprep.subr.mxu0 0.0
    %252 = vmatpush1.msra.mxu0 %v118
    %253 = vmatprep.subr.mxu0 0.0
    %254 = vmatpush1.msra.mxu0 %v119
    %255 = vmatprep.subr.mxu0 0.0
    %256 = vmatpush1.msra.mxu0 %v120
    %257 = vmatprep.subr.mxu0 0.0
    %258 = vmatpush1.msra.mxu0 %v121
    %259 = vmatprep.subr.mxu0 0.0
    %260 = vmatpush1.msra.mxu0 %v122
    %261 = vmatprep.subr.mxu0 0.0
    %262 = vmatpush1.msra.mxu0 %v123
    %263 = vmatprep.subr.mxu0 0.0
    %264 = vmatpush1.msra.mxu0 %v124
    %265 = vmatprep.subr.mxu0 0.0
    %266 = vmatpush1.msra.mxu0 %v125
    %267 = vmatprep.subr.mxu0 0.0
    %268 = vmatpush1.msra.mxu0 %v126
    %269 = vmatprep.subr.mxu0 0.0
    %270 = vmatpush1.msra.mxu0 %v127
    %271 = vmatprep.subr.mxu0 0.0
    %272 = vmatpush1.msra.mxu0 %v128
    %273 = vmatprep.subr.mxu0 0.0
    %274 = vmatpush1.msra.mxu0 %v129
    %275 = vmatprep.subr.mxu0 0.0
    %276 = vmatpush1.msra.mxu0 %v130
    %277 = vmatprep.subr.mxu0 0.0
    %278 = vmatpush1.msra.mxu0 %v131
    %279 = vmatprep.subr.mxu0 0.0
    %280 = vmatpush1.msra.mxu0 %v142
    %281 = vmatprep.subr.mxu0 0.0
    %282 = vmatpush1.msra.mxu0 0.0
    %283 = vmatprep.subr.mxu0 0.0
    %284 = vmatpush1.msra.mxu0 0.0
    %285 = vmatprep.subr.mxu0 0.0
    %286 = vmatpush1.msra.mxu0 0.0
    %287 = vmatprep.subr.mxu0 0.0
    %288 = vmatpush1.msra.mxu0 0.0
    %289 = vmatprep.subr.mxu0 0.0
    %290 = vmatpush1.msra.mxu0 0.0
    %291 = vmatprep.subr.mxu0 0.0
    %292 = vmatpush1.msra.mxu0 0.0
    %293 = vmatprep.mubr.f32.mxu0 %v224
    %294 = vmatmul.mubr.f32.gmra.mrb[0].mxu0 %v219
    %v295 = vpop.f32.mrb[0].mxu0
    %v296 = vadd.f32 0.0, %v295
    %v297 = vpop.f32.mrb[0].mxu0
    %298 = vmatprep.mubr.f32.mxu0 %v227
    %299 = vmatmul.mubr.f32.gmra.mrb[0].mxu0 %v221
    %v300 = vpop.f32.mrb[0].mxu0
    %v301 = vadd.f32 0.0, %v300
    %v302 = vpop.f32.mrb[0].mxu0
    %303 = vdwg.mxu0
    %v304 = vld [vmem:[#allocation2] sm:$0x1]
    %vm305 = vcmask 244736
    %v306 = vsel %vm305, %v296, 0.0
    %v307 = vsel %vm305, %v301, 0.0
    %v308 = vadd.f32 %v306, %v307
    %v309 = vrot.slane %v308, 4
    %v310 = vadd.f32 %v308, %v309
    %v311 = vrot.slane %v310, 2
    %v312 = vadd.f32 %v310, %v311
    %v313 = vrot.slane %v312, 1
    %v314 = vadd.f32 %v312, %v313
    %v315 = vadd.f32 %v304, %v314
    %vm316 = vcmask 237568
    %317 = vst.msk [vmem:[#allocation2] sm:$0x1] %vm316, %v315
    %v318 = vld [vmem:[#allocation4] sm:$0x1]
    %v319 = vmul.f32 %v211, %v211
    %v320 = vmul.f32 %v216, %v216
    %v321 = vsel %vm305, %v319, 0.0
    %v322 = vsel %vm305, %v320, 0.0
    %v323 = vadd.f32 %v321, %v322
    %v324 = vrot.slane %v323, 4
    %v325 = vadd.f32 %v323, %v324
    %v326 = vrot.slane %v325, 2
    %v327 = vadd.f32 %v325, %v326
    %v328 = vrot.slane %v327, 1
    %v329 = vadd.f32 %v327, %v328
    %v330 = vadd.f32 %v318, %v329
    %331 = vst.msk [vmem:[#allocation4] sm:$0x1] %vm316, %v330
    // Predicated region
    $region18: #{tpu_custom_call.1} parent=1 // pred_check
      _
    $region19: #{tpu_custom_call.1} parent=1 // pred_check_branch
      %333 = sbr.rel (0) target = $region21
    $region20: #{tpu_custom_call.1} parent=1 // pred_region
      %s335 = ssub.s32 16, 16
      %336 = vsyncadd [#allocation3], %s335
      %s338 = sshll.u32 [#allocation2], 4
      %s339 = int_to_ptr.vmem [resolvable:$true] %s338
      %341 = dma.vmem_to_hbm [thread:$0]  %s339, 16, %s3, [#allocation3]
    $region21: #{tpu_custom_call.1} parent=1 // pred_fallthru
      _
    // Predicated region
    $region22: #{tpu_custom_call.1} parent=1 // pred_check
      _
    $region23: #{tpu_custom_call.1} parent=1 // pred_check_branch
      %343 = sbr.rel (0) target = $region25
    $region24: #{tpu_custom_call.1} parent=1 // pred_region
      %s345 = ssub.s32 16, 16
      %346 = vsyncadd [#allocation5], %s345
      %s348 = sshll.u32 [#allocation4], 4
      %s349 = int_to_ptr.vmem [resolvable:$true] %s348
      %351 = dma.vmem_to_hbm [thread:$0]  %s349, 16, %s4, [#allocation5]
    $region25: #{tpu_custom_call.1} parent=1 // pred_fallthru
      _
    // Predicated region
    $region26: #{tpu_custom_call.1} parent=1 // pred_check
      _
    $region27: #{tpu_custom_call.1} parent=1 // pred_check_branch
      %353 = sbr.rel (0) target = $region29
    $region28: #{tpu_custom_call.1} parent=1 // pred_region
      %354 = dma.done [#allocation3], 16
    $region29: #{tpu_custom_call.1} parent=1 // pred_fallthru
      _
    // Predicated region
    $region30: #{tpu_custom_call.1} parent=1 // pred_check
      _
    $region31: #{tpu_custom_call.1} parent=1 // pred_check_branch
      %356 = sbr.rel (0) target = $region33
    $region32: #{tpu_custom_call.1} parent=1 // pred_region
      %357 = dma.done [#allocation5], 16
    $region33: #{tpu_custom_call.1} parent=1 // pred_fallthru
      _
    %358 = vsyncpa [#allocation3], 1
    %359 = vsyncpa [#allocation5], 1

</llo_original>
